<compile_context>
chip_gen: v7x
topology: tpu7x:2x2x1
jax: 0.10.0
libtpu: 0.0.40
codegen_flags: <defaults>
</compile_context>

<pallas_src>
import functools

import jax
import jax.numpy as jnp
from jax.experimental import pallas as pl
from jax.experimental.pallas import tpu as pltpu


def _round_up(x, m):
    return ((x + m - 1) // m) * m


_MIB = 1024 * 1024
# Per-grid-step data budget (covers double-buffered in+out blocks and the f32
# temporaries). Conservative for v7x (64 MiB physical / 32 MiB scoped default).
_FUSED_VMEM_BUDGET = 16 * _MIB


# --------------------------------------------------------------------------- #
# Fused path: pool + gate + scale in one kernel (one HBM read, one HBM write). #
# --------------------------------------------------------------------------- #
def _fused_kernel(x_ref, w1_ref, w2_ref, o_ref, *, inv_hw):
    """x_ref/o_ref: (Nb, C, HW); w1_ref: (C, Crp); w2_ref: (Crp, C)."""
    xs = x_ref[...].astype(jnp.float32)
    # AdaptiveAvgPool2d(1): sum over the lane (spatial) axis, divide by true H*W.
    pooled = jnp.sum(xs, axis=-1) * inv_hw                                   # (Nb, C)
    # 1x1 conv (C -> C/r), bias=False, ReLU.
    hmid = jnp.maximum(
        jnp.dot(pooled, w1_ref[...], preferred_element_type=jnp.float32), 0.0)
    # 1x1 conv (C/r -> C), bias=False, Sigmoid.
    att = jax.nn.sigmoid(
        jnp.dot(hmid, w2_ref[...], preferred_element_type=jnp.float32))      # (Nb, C)
    # Re-read x from VMEM for the scale pass (do not keep the big tile live across
    # the matmul/sigmoid region -> lower vreg pressure, no spill risk).
    o_ref[...] = (x_ref[...].astype(jnp.float32) * att[:, :, None]).astype(o_ref.dtype)


# --------------------------------------------------------------------------- #
# Two-pass fallback for large (C, HW) slabs (VMEM-limited, e.g. v7x 64 MiB).   #
# --------------------------------------------------------------------------- #
def _pool_gate_kernel(x_ref, w1_ref, w2_ref, att_ref, acc_ref, *, hw, hw_tile, inv_hw):
    """Pass 1: spatial mean (tiled over HW) + both 1x1 convs + sigmoid gate."""
    k = pl.program_id(1)

    @pl.when(k == 0)
    def _():
        acc_ref[...] = jnp.zeros_like(acc_ref)

    xs = x_ref[...].astype(jnp.float32)                                      # (1, C, hw_tile)
    # Mask lanes beyond the true H*W (last, possibly partial, tile).
    lane = jax.lax.broadcasted_iota(jnp.int32, xs.shape, 2) + k * hw_tile
    xs = jnp.where(lane < hw, xs, 0.0)
    acc_ref[...] += jnp.sum(xs, axis=-1)                                     # (1, C)

    @pl.when(k == pl.num_programs(1) - 1)
    def _():
        pooled = acc_ref[...] * inv_hw
        hmid = jnp.maximum(
            jnp.dot(pooled, w1_ref[...], preferred_element_type=jnp.float32), 0.0)
        att = jax.nn.sigmoid(
            jnp.dot(hmid, w2_ref[...], preferred_element_type=jnp.float32))  # (1, C)
        att_ref[...] = att[:, :, None]                                       # (1, C, 1)


def _scale_kernel(x_ref, att_ref, o_ref):
    """Pass 2: out = x * gate, spatially tiled, no cross-lane ops in the hot loop."""
    o_ref[...] = (x_ref[...].astype(jnp.float32) * att_ref[...]).astype(o_ref.dtype)


# --------------------------------------------------------------------------- #
# Wrapper                                                                      #
# --------------------------------------------------------------------------- #
def channelwise_pallas(x, w1, w2, *, force_two_pass=False, two_pass_hw_tile=None):
    """ChannelWise forward.

    x : (N, C, H, W) NCHW (f32 or bf16; output dtype matches x)
    w1: (C//r, C, 1, 1) PyTorch Conv2d weight (first 1x1 conv, bias=False)
    w2: (C, C//r, 1, 1) PyTorch Conv2d weight (second 1x1 conv, bias=False)
    """
    n, c, h, w = x.shape
    cr = w1.shape[0]
    hw = h * w
    crp = _round_up(cr, 128)            # lane-pad only the tiny hidden dim (exact zeros)

    x_bytes = x.dtype.itemsize
    o_dtype = x.dtype
    o_bytes = x_bytes

    # PyTorch conv weight (out, in, 1, 1) -> matmul operand (in, out), f32.
    w1m = jnp.pad(w1.reshape(cr, c).T.astype(jnp.float32), ((0, 0), (0, crp - cr)))
    w2m = jnp.pad(w2.reshape(c, cr).T.astype(jnp.float32), ((0, crp - cr), (0, 0)))
    weight_bytes = 2 * c * crp * 4

    # (N, C, H, W) -> (N, C, H*W): contiguous view, no transpose, NO padding -- the
    # kernel blocks use the full (C, HW) extents so unaligned C/HW get masked
    # loads/stores instead of an extra pad/slice pass over HBM.
    x3 = x.reshape(n, c, hw)
    inv_hw = 1.0 / float(hw)

    # Per-batch-element VMEM need in the fused kernel: double-buffered input + output
    # blocks plus the in-kernel f32 temporaries.
    per_batch = c * hw * (2 * x_bytes + 2 * o_bytes + 8)

    flops = 2 * n * c * hw + 4 * n * c * cr
    bytes_accessed = n * c * hw * (x_bytes + o_bytes) + weight_bytes
    fused_cost = pl.CostEstimate(flops=flops, transcendentals=n * c,
                                 bytes_accessed=bytes_accessed)

    if not force_two_pass and per_batch + weight_bytes <= _FUSED_VMEM_BUDGET:
        # -------- single fused kernel --------
        nb = max(1, min(n, _FUSED_VMEM_BUDGET // per_batch))
        if n >= 2:
            nb = min(nb, pl.cdiv(n, 2))      # keep >= 2 grid steps for v7x megacore
        grid = (pl.cdiv(n, nb),)
        needed = nb * per_batch + weight_bytes
        vmem_limit = int(min(48 * _MIB, max(32 * _MIB, needed * 5 // 4)))

        out = pl.pallas_call(
            functools.partial(_fused_kernel, inv_hw=inv_hw),
            out_shape=jax.ShapeDtypeStruct((n, c, hw), o_dtype),
            grid=grid,
            in_specs=[
                pl.BlockSpec((nb, c, hw), lambda i: (i, 0, 0)),
                pl.BlockSpec((c, crp), lambda i: (0, 0)),
                pl.BlockSpec((crp, c), lambda i: (0, 0)),
            ],
            out_specs=pl.BlockSpec((nb, c, hw), lambda i: (i, 0, 0)),
            compiler_params=pltpu.CompilerParams(
                dimension_semantics=("parallel",),
                vmem_limit_bytes=vmem_limit),
            cost_estimate=fused_cost,
        )(x3, w1m, w2m)
        return out.reshape(n, c, h, w)

    # -------- two-pass fallback: pool+gate, then spatially tiled scale --------
    elem_factor = 2 * x_bytes + 4       # double-buffered input block + f32 temp
    if two_pass_hw_tile is not None:
        hw_tile = two_pass_hw_tile
    else:
        hw_tile = max(128, (_FUSED_VMEM_BUDGET // (c * elem_factor)) // 128 * 128)
    hw_tile = min(hw_tile, _round_up(hw, 128))
    kt = pl.cdiv(hw, hw_tile)

    pool_cost = pl.CostEstimate(flops=n * c * hw + 4 * n * c * cr,
                                transcendentals=n * c,
                                bytes_accessed=n * c * hw * x_bytes + weight_bytes)
    att = pl.pallas_call(
        functools.partial(_pool_gate_kernel, hw=hw, hw_tile=hw_tile, inv_hw=inv_hw),
        out_shape=jax.ShapeDtypeStruct((n, c, 1), jnp.float32),
        grid=(n, kt),
        in_specs=[
            pl.BlockSpec((1, c, hw_tile), lambda b, k: (b, 0, k)),
            pl.BlockSpec((c, crp), lambda b, k: (0, 0)),
            pl.BlockSpec((crp, c), lambda b, k: (0, 0)),
        ],
        out_specs=pl.BlockSpec((1, c, 1), lambda b, k: (b, 0, 0)),
        scratch_shapes=[pltpu.VMEM((1, c), jnp.float32)],
        compiler_params=pltpu.CompilerParams(
            dimension_semantics=("parallel", "arbitrary"),
            vmem_limit_bytes=int(min(48 * _MIB, max(
                32 * _MIB, 2 * c * hw_tile * (x_bytes + 4) + weight_bytes)))),
        cost_estimate=pool_cost,
    )(x3, w1m, w2m)

    scale_cost = pl.CostEstimate(flops=n * c * hw, transcendentals=0,
                                 bytes_accessed=n * c * hw * (x_bytes + o_bytes))
    out = pl.pallas_call(
        _scale_kernel,
        out_shape=jax.ShapeDtypeStruct((n, c, hw), o_dtype),
        grid=(n, kt),
        in_specs=[
            pl.BlockSpec((1, c, hw_tile), lambda b, k: (b, 0, k)),
            pl.BlockSpec((1, c, 1), lambda b, k: (b, 0, 0)),
        ],
        out_specs=pl.BlockSpec((1, c, hw_tile), lambda b, k: (b, 0, k)),
        compiler_params=pltpu.CompilerParams(
            dimension_semantics=("parallel", "parallel"),
            vmem_limit_bytes=int(min(48 * _MIB, max(
                32 * _MIB, 2 * c * hw_tile * (x_bytes + o_bytes + 8))))),
        cost_estimate=scale_cost,
    )(x3, att)
    return out.reshape(n, c, h, w)


def channelwise_ref(x, w1, w2):
    """Pure-JAX reference matching the PyTorch module (inference semantics)."""
    n, c, h, w = x.shape
    cr = w1.shape[0]
    pooled = jnp.mean(x.astype(jnp.float32), axis=(2, 3))                    # (N, C)
    hmid = jax.nn.relu(jnp.einsum('nc,oc->no', pooled,
                                  w1.reshape(cr, c).astype(jnp.float32)))
    att = jax.nn.sigmoid(jnp.einsum('nr,or->no', hmid,
                                    w2.reshape(c, cr).astype(jnp.float32)))
    return (x.astype(jnp.float32) * att[:, :, None, None]).astype(x.dtype)


if __name__ == "__main__":
    key = jax.random.PRNGKey(0)

    def make_case(k, n, c, hh, ww, reduction=4):
        k1, k2, k3 = jax.random.split(k, 3)
        cr = c // reduction
        x = jax.random.normal(k1, (n, c, hh, ww), dtype=jnp.float32)
        w1 = jax.random.normal(k2, (cr, c, 1, 1), dtype=jnp.float32) * (1.0 / c) ** 0.5
        w2 = jax.random.normal(k3, (c, cr, 1, 1), dtype=jnp.float32) * (1.0 / cr) ** 0.5
        return x, w1, w2

    keys = jax.random.split(key, 2)
    cases = [
        make_case(keys[0], 2, 64, 16, 16),   # aligned C / HW
        make_case(keys[1], 2, 32, 10, 10),   # HW (=100) not a lane multiple
    ]

    fused = jax.jit(channelwise_pallas)
    two_pass = jax.jit(functools.partial(channelwise_pallas,
                                         force_two_pass=True, two_pass_hw_tile=128))

    for x, w1, w2 in cases:
        y_ref = channelwise_ref(x, w1, w2)
        for fn in (fused, two_pass):
            y = jax.block_until_ready(fn(x, w1, w2))
            assert y.shape == x.shape, y.shape
            assert bool(jnp.all(jnp.isfinite(y)))
            max_err = float(jnp.max(jnp.abs(y - y_ref)))
            assert max_err < 1e-4, f"mismatch vs reference: {max_err}"
    print("KERNEL_OK")
</pallas_src>

<mosaic_0001>
module attributes {stable_mosaic.version = 11 : i64} {
  func.func @_fused_kernel(%arg0: i32, %arg1: memref<1x64x256xf32, #tpu.memory_space<vmem>>, %arg2: memref<64x128xf32, #tpu.memory_space<vmem>>, %arg3: memref<128x64xf32, #tpu.memory_space<vmem>>, %arg4: memref<1x64x256xf32, #tpu.memory_space<vmem>>) attributes {dimension_semantics = [#tpu.dimension_semantics<parallel>], iteration_bounds = array<i64: 2>, scalar_prefetch = 0 : i64, scratch_operands = 0 : i64, tpu.core_type = #tpu.core_type<tc>, window_params = [{transform_indices = @transform_0, window_bounds = array<i64: 1, 64, 256>}, {pipeline_mode = #tpu.pipeline_mode<synchronous>, transform_indices = @transform_1, window_bounds = array<i64: 64, 128>}, {pipeline_mode = #tpu.pipeline_mode<synchronous>, transform_indices = @transform_2, window_bounds = array<i64: 128, 64>}, {transform_indices = @transform_3, window_bounds = array<i64: 1, 64, 256>}]} {
    %c0 = arith.constant 0 : index
    %c0_0 = arith.constant 0 : index
    %c0_1 = arith.constant 0 : index
    %0 = vector.load %arg1[%c0, %c0_0, %c0_1] : memref<1x64x256xf32, #tpu.memory_space<vmem>>, vector<1x64x256xf32>
    %cst = arith.constant dense<0.000000e+00> : vector<1x64xf32>
    %1 = vector.multi_reduction <add>, %0, %cst [2] : vector<1x64x256xf32> to vector<1x64xf32>
    %cst_2 = arith.constant 3.906250e-03 : f32
    %2 = vector.broadcast %cst_2 : f32 to vector<1x64xf32>
    %3 = arith.mulf %1, %2 : vector<1x64xf32>
    %c0_3 = arith.constant 0 : index
    %c0_4 = arith.constant 0 : index
    %4 = vector.load %arg2[%c0_3, %c0_4] : memref<64x128xf32, #tpu.memory_space<vmem>>, vector<64x128xf32>
    %cst_5 = arith.constant dense<0.000000e+00> : vector<1x128xf32>
    %5 = tpu.matmul %3, %4, %cst_5 {dimension_numbers = #tpu.dot_dimension_numbers<[1], [0], [0], [1], [0, 0, 1, 1], [], []>} : vector<1x64xf32>, vector<64x128xf32>, vector<1x128xf32> -> vector<1x128xf32>
    %cst_6 = arith.constant 0.000000e+00 : f32
    %6 = vector.broadcast %cst_6 : f32 to vector<1x128xf32>
    %7 = arith.maximumf %5, %6 : vector<1x128xf32>
    %c0_7 = arith.constant 0 : index
    %c0_8 = arith.constant 0 : index
    %8 = vector.load %arg3[%c0_7, %c0_8] : memref<128x64xf32, #tpu.memory_space<vmem>>, vector<128x64xf32>
    %cst_9 = arith.constant dense<0.000000e+00> : vector<1x64xf32>
    %9 = tpu.matmul %7, %8, %cst_9 {dimension_numbers = #tpu.dot_dimension_numbers<[1], [0], [0], [1], [0, 0, 1, 1], [], []>} : vector<1x128xf32>, vector<128x64xf32>, vector<1x64xf32> -> vector<1x64xf32>
    %10 = arith.negf %9 : vector<1x64xf32>
    %11 = math.exp %10 : vector<1x64xf32>
    %cst_10 = arith.constant 1.000000e+00 : f32
    %12 = vector.broadcast %cst_10 : f32 to vector<1x64xf32>
    %13 = arith.addf %12, %11 : vector<1x64xf32>
    %14 = arith.divf %12, %13 : vector<1x64xf32>
    %c0_11 = arith.constant 0 : index
    %c0_12 = arith.constant 0 : index
    %c0_13 = arith.constant 0 : index
    %15 = vector.load %arg1[%c0_11, %c0_12, %c0_13] : memref<1x64x256xf32, #tpu.memory_space<vmem>>, vector<1x64x256xf32>
    %16 = vector.shape_cast %14 : vector<1x64xf32> to vector<1x64x1xf32>
    %17 = vector.broadcast %16 : vector<1x64x1xf32> to vector<1x64x256xf32>
    %18 = arith.mulf %15, %17 : vector<1x64x256xf32>
    %c0_14 = arith.constant 0 : index
    %c0_15 = arith.constant 0 : index
    %c0_16 = arith.constant 0 : index
    %19 = vector.load %arg4[%c0_14, %c0_15, %c0_16] : memref<1x64x256xf32, #tpu.memory_space<vmem>>, vector<1x64x256xf32>
    tpu.vector_store %arg4[%c0_14, %c0_15, %c0_16], %18 {strides = array<i32>} : memref<1x64x256xf32, #tpu.memory_space<vmem>>, vector<1x64x256xf32>,
    return
  }
  func.func @transform_0(%arg0: i32) -> (i32, i32, i32) {
    %c0_i32 = arith.constant 0 : i32
    %c0_i32_0 = arith.constant 0 : i32
    %c0_i32_1 = arith.constant 0 : i32
    return %arg0, %c0_i32, %c0_i32_0 : i32, i32, i32
  }
  func.func @transform_1(%arg0: i32) -> (i32, i32) {
    %c0_i32 = arith.constant 0 : i32
    %c0_i32_0 = arith.constant 0 : i32
    %c0_i32_1 = arith.constant 0 : i32
    return %c0_i32, %c0_i32_0 : i32, i32
  }
  func.func @transform_2(%arg0: i32) -> (i32, i32) {
    %c0_i32 = arith.constant 0 : i32
    %c0_i32_0 = arith.constant 0 : i32
    %c0_i32_1 = arith.constant 0 : i32
    return %c0_i32, %c0_i32_0 : i32, i32
  }
  func.func @transform_3(%arg0: i32) -> (i32, i32, i32) {
    %c0_i32 = arith.constant 0 : i32
    %c0_i32_0 = arith.constant 0 : i32
    %c0_i32_1 = arith.constant 0 : i32
    return %arg0, %c0_i32, %c0_i32_0 : i32, i32, i32
  }
}

</mosaic_0001>

<llo_original>
// kernel: channelwise_pallas.1
$region0: #{channelwise_pallas.1}
  #allocation0 [shape = 'u32[]', space=smem, size = 0x4, offset = 0x4, fixed_abs, tag = 'smem constant byte address 0x4 - core index']
  #allocation1 [shape = 'u32[144,128]{1,0:T(1,128)}', space=vmem, size = 0x12000, scoped, tag = 'internal scratch']
  %s0 = inlined_call_operand.vmem [shape: f32[2,64,256], index: 0, kind: input, shape index: {}]
  %s1 = inlined_call_operand.vmem [shape: f32[64,128], index: 1, kind: input, shape index: {}]
  %s2 = inlined_call_operand.vmem [shape: f32[128,64], index: 2, kind: input, shape index: {}]
  %s3 = inlined_call_operand.vmem [shape: f32[2,64,256], index: 3, kind: output, shape index: {}]
  %s4 = sld [smem:[#allocation0]]
  $region45: #{channelwise_pallas.1} parent=0
    _
  %s6 = ssub.s32 1, %s4
  %s7 = scalar_select 0, %s6, %s4
  loop: start=0, step=1, limit=4
  $region2: #{channelwise_pallas.1} parent=0 // loop_pre_header
    _
  $region3: #{channelwise_pallas.1} parent=0 // loop_header
    %s9 = sphi 0, %s13
    %p10 = scmp.ge.s32.totalorder %s9, 4
    %s19 = sphi 0, %s21
    %s22 = sphi 0, %s19
    %s23 = sphi 0, %s22
    %s39 = sphi 0, %s23
    %s43 = sphi 0, %s43
    %s45 = sphi 0, %s43
    %s46 = sphi 0, %s45
    %s60 = sphi 0, %s46
    %s64 = sphi 0, %s64
    %s66 = sphi 0, %s64
    %s67 = sphi 0, %s66
    %s81 = sphi 0, %s67
    %s87 = sphi 0, %s89
    %s90 = sphi 0, %s87
    %s91 = sphi 0, %s90
    %s107 = sphi 0, %s91
  $region4: #{channelwise_pallas.1} parent=0 // loop_header_branch
    %12 = sbr.rel (%p10) target = $region8
  $region5: #{channelwise_pallas.1} parent=0 // loop_body
    %s14 = ssub.s32 %s9, 1
    %s15 = ssub.s32 %s9, 2
    %s16 = sadd.s32 %s9, 1
    %s17 = ssub.s32 %s9, %s16
    %p18 = scmp.eq.s32.totalorder %s17, 0
    %s20 = sadd.s32 %s19, 1
    %s21 = scalar_select %p18, %s19, %s20
    %p24 = pneg %p18
    %p25 = scmp.eq.s32.totalorder %s9, 1
    %p26 = por %p24, %p25
    %p27 = scmp.ne.s32.totalorder %s19, %s22
    %p28 = scmp.eq.s32.totalorder %s9, 0
    %p29 = por %p27, %p28
    %p30 = scmp.ne.s32.totalorder %s19, %s22
    %p31 = scmp.eq.s32.totalorder %s14, 1
    %p32 = por %p30, %p31
    %p33 = scmp.ne.s32.totalorder %s22, %s23
    %p34 = scmp.eq.s32.totalorder %s14, 0
    %p35 = por %p33, %p34
    %p36 = scmp.ne.s32.totalorder %s22, %s23
    %p37 = scmp.eq.s32.totalorder %s15, 1
    %p38 = por %p36, %p37
    %p40 = scmp.ne.s32.totalorder %s23, %s39
    %p41 = scmp.eq.s32.totalorder %s15, 0
    %p42 = por %p40, %p41
    %s44 = sadd.s32 %s43, 1
    %p47 = scmp.eq.s32.totalorder %s9, 1
    %p48 = scmp.ne.s32.totalorder %s43, %s45
    %p49 = scmp.eq.s32.totalorder %s9, 0
    %p50 = por %p48, %p49
    %p51 = scmp.ne.s32.totalorder %s43, %s45
    %p52 = scmp.eq.s32.totalorder %s14, 1
    %p53 = por %p51, %p52
    %p54 = scmp.ne.s32.totalorder %s45, %s46
    %p55 = scmp.eq.s32.totalorder %s14, 0
    %p56 = por %p54, %p55
    %p57 = scmp.ne.s32.totalorder %s45, %s46
    %p58 = scmp.eq.s32.totalorder %s15, 1
    %p59 = por %p57, %p58
    %p61 = scmp.ne.s32.totalorder %s46, %s60
    %p62 = scmp.eq.s32.totalorder %s15, 0
    %p63 = por %p61, %p62
    %s65 = sadd.s32 %s64, 1
    %p68 = scmp.eq.s32.totalorder %s9, 1
    %p69 = scmp.ne.s32.totalorder %s64, %s66
    %p70 = scmp.eq.s32.totalorder %s9, 0
    %p71 = por %p69, %p70
    %p72 = scmp.ne.s32.totalorder %s64, %s66
    %p73 = scmp.eq.s32.totalorder %s14, 1
    %p74 = por %p72, %p73
    %p75 = scmp.ne.s32.totalorder %s66, %s67
    %p76 = scmp.eq.s32.totalorder %s14, 0
    %p77 = por %p75, %p76
    %p78 = scmp.ne.s32.totalorder %s66, %s67
    %p79 = scmp.eq.s32.totalorder %s15, 1
    %p80 = por %p78, %p79
    %p82 = scmp.ne.s32.totalorder %s67, %s81
    %p83 = scmp.eq.s32.totalorder %s15, 0
    %p84 = por %p82, %p83
    %s85 = ssub.s32 %s9, %s16
    %p86 = scmp.eq.s32.totalorder %s85, 0
    %s88 = sadd.s32 %s87, 1
    %s89 = scalar_select %p86, %s87, %s88
    %p92 = pneg %p86
    %p93 = scmp.eq.s32.totalorder %s9, 1
    %p94 = por %p92, %p93
    %p95 = scmp.ne.s32.totalorder %s87, %s90
    %p96 = scmp.eq.s32.totalorder %s9, 0
    %p97 = por %p95, %p96
    %p98 = scmp.ne.s32.totalorder %s87, %s90
    %p99 = scmp.eq.s32.totalorder %s14, 1
    %p100 = por %p98, %p99
    %p101 = scmp.ne.s32.totalorder %s90, %s91
    %p102 = scmp.eq.s32.totalorder %s14, 0
    %p103 = por %p101, %p102
    %p104 = scmp.ne.s32.totalorder %s90, %s91
    %p105 = scmp.eq.s32.totalorder %s15, 1
    %p106 = por %p104, %p105
    %p108 = scmp.ne.s32.totalorder %s91, %s107
    %p109 = scmp.eq.s32.totalorder %s15, 0
    %p110 = por %p108, %p109
    %p111 = scmp.le.s32.totalorder 1, %s9
    %p112 = scmp.lt.s32.totalorder %s9, 3
    %p113 = pnand %p111, %p112
    %p114 = pneg %p113
    // Predicated region
    $region9: #{channelwise_pallas.1} parent=5 // pred_check
      _
    $region10: #{channelwise_pallas.1} parent=5 // pred_check_branch
      %116 = sbr.rel (%p113) target = $region12
    $region11: #{channelwise_pallas.1} parent=5 // pred_region
      %s117 = ssub.s32 %s9, 1
      // Predicated region
      $region13: #{channelwise_pallas.1} parent=11 // pred_check
        %p118 = pneg %p56
      $region14: #{channelwise_pallas.1} parent=11 // pred_check_branch
        %120 = sbr.rel (%p118) target = $region16
      $region15: #{channelwise_pallas.1} parent=11 // pred_region
        _
      $region16: #{channelwise_pallas.1} parent=11 // pred_fallthru
        _
      // Predicated region
      $region17: #{channelwise_pallas.1} parent=11 // pred_check
        %p121 = pneg %p77
      $region18: #{channelwise_pallas.1} parent=11 // pred_check_branch
        %123 = sbr.rel (%p121) target = $region20
      $region19: #{channelwise_pallas.1} parent=11 // pred_region
        _
      $region20: #{channelwise_pallas.1} parent=11 // pred_fallthru
        _
    $region12: #{channelwise_pallas.1} parent=5 // pred_fallthru
      _
    %p124 = scmp.lt.s32.totalorder %s9, 2
    // Predicated region
    $region21: #{channelwise_pallas.1} parent=5 // pred_check
      %p125 = pneg %p124
    $region22: #{channelwise_pallas.1} parent=5 // pred_check_branch
      %127 = sbr.rel (%p125) target = $region24
    $region23: #{channelwise_pallas.1} parent=5 // pred_region
      // Predicated region
      $region25: #{channelwise_pallas.1} parent=23 // pred_check
        %p128 = pneg %p29
      $region26: #{channelwise_pallas.1} parent=23 // pred_check_branch
        %130 = sbr.rel (%p128) target = $region28
      $region27: #{channelwise_pallas.1} parent=23 // pred_region
        %p131 = scmp.lt.s32.totalorder %s9, 1
        %s132 = scalar_select %p131, %s9, 1
        %s133 = smul.addr %s132, 16
        %s134 = smul.addr %s133, 8
        %s135 = scalar_lea.vmem %s0, %s134
      $region28: #{channelwise_pallas.1} parent=23 // pred_fallthru
        _
    $region24: #{channelwise_pallas.1} parent=5 // pred_fallthru
      _
    %p136 = scmp.le.s32.totalorder 1, %s9
    %p137 = scmp.lt.s32.totalorder %s9, 3
    %p138 = pnand %p136, %p137
    %p139 = pneg %p138
    // Predicated region
    $region29: #{channelwise_pallas.1} parent=5 // pred_check
      _
    $region30: #{channelwise_pallas.1} parent=5 // pred_check_branch
      %141 = sbr.rel (%p138) target = $region32
    $region31: #{channelwise_pallas.1} parent=5 // pred_region
      %s142 = ssub.s32 %s9, 1
      %p143 = scmp.lt.s32.totalorder %s14, 1
      %s144 = scalar_select %p143, %s14, 1
      %s145 = smul.addr %s144, 16
      %s146 = smul.addr %s145, 8
      %s147 = scalar_lea.vmem %s0, %s146
      %p148 = pneg %p35
      %p149 = pneg %p32
      %p150 = pneg %p56
      %p151 = pneg %p53
      %p152 = pneg %p77
      %p153 = pneg %p74
      %p154 = pneg %p103
      %p155 = pneg %p100
      %p156 = scmp.lt.s32.totalorder %s14, 1
      %s157 = scalar_select %p156, %s14, 1
      %s158 = smul.addr %s157, 16
      %s159 = smul.addr %s158, 8
      %s160 = scalar_lea.vmem %s3, %s159
      %p161 = scmp.lt.s32.totalorder %s14, 1
      %s162 = scalar_select %p161, %s14, 1
      %s163 = smul.addr %s162, 16
      %s164 = smul.addr %s163, 8
      %s165 = scalar_lea.vmem %s0, %s164
      %p166 = scmp.lt.s32.totalorder %s14, 1
      %s167 = scalar_select %p166, %s14, 1
      %s168 = smul.addr %s167, 16
      %s169 = smul.addr %s168, 8
      %s170 = scalar_lea.vmem %s3, %s169
      %v171 = vld [vmem:[%s165] sm:$0xff]
      %v172 = vld [vmem:[%s165 + $0x8] sm:$0xff]
      %v173 = vld [vmem:[%s165 + $0x10] sm:$0xff]
      %v174 = vld [vmem:[%s165 + $0x18] sm:$0xff]
      %v175 = vld [vmem:[%s165 + $0x20] sm:$0xff]
      %v176 = vld [vmem:[%s165 + $0x28] sm:$0xff]
      %v177 = vld [vmem:[%s165 + $0x30] sm:$0xff]
      %v178 = vld [vmem:[%s165 + $0x38] sm:$0xff]
      %v179 = vld [vmem:[%s165 + $0x40] sm:$0xff]
      %v180 = vld [vmem:[%s165 + $0x48] sm:$0xff]
      %v181 = vld [vmem:[%s165 + $0x50] sm:$0xff]
      %v182 = vld [vmem:[%s165 + $0x58] sm:$0xff]
      %v183 = vld [vmem:[%s165 + $0x60] sm:$0xff]
      %v184 = vld [vmem:[%s165 + $0x68] sm:$0xff]
      %v185 = vld [vmem:[%s165 + $0x70] sm:$0xff]
      %v186 = vld [vmem:[%s165 + $0x78] sm:$0xff]
      %v187 = vadd.f32 %v171, %v172
      %188 = vadd.xlane.f32.xlu0 %v187
      %v189 = vpop.xlane.xlu0 %188
      %v190 = vadd.f32 %v173, %v174
      %191 = vadd.xlane.f32.xlu0 %v190
      %v192 = vpop.xlane.xlu0 %191
      %v193 = vadd.f32 %v175, %v176
      %194 = vadd.xlane.f32.xlu0 %v193
      %v195 = vpop.xlane.xlu0 %194
      %v196 = vadd.f32 %v177, %v178
      %197 = vadd.xlane.f32.xlu0 %v196
      %v198 = vpop.xlane.xlu0 %197
      %v199 = vadd.f32 %v179, %v180
      %200 = vadd.xlane.f32.xlu0 %v199
      %v201 = vpop.xlane.xlu0 %200
      %v202 = vadd.f32 %v181, %v182
      %203 = vadd.xlane.f32.xlu0 %v202
      %v204 = vpop.xlane.xlu0 %203
      %v205 = vadd.f32 %v183, %v184
      %206 = vadd.xlane.f32.xlu0 %v205
      %v207 = vpop.xlane.xlu0 %206
      %v208 = vadd.f32 %v185, %v186
      %209 = vadd.xlane.f32.xlu0 %v208
      %v210 = vpop.xlane.xlu0 %209
      %v211 = vmul.f32 %v189, 0.00390625
      %v212 = vmul.f32 %v192, 0.00390625
      %v213 = vmul.f32 %v195, 0.00390625
      %v214 = vmul.f32 %v198, 0.00390625
      %v215 = vmul.f32 %v201, 0.00390625
      %v216 = vmul.f32 %v204, 0.00390625
      %v217 = vmul.f32 %v207, 0.00390625
      %v218 = vmul.f32 %v210, 0.00390625
      %v219 = vld [vmem:[%s1] sm:$0xff]
      %v220 = vld [vmem:[%s1 + $0x8] sm:$0xff]
      %v221 = vld [vmem:[%s1 + $0x10] sm:$0xff]
      %v222 = vld [vmem:[%s1 + $0x18] sm:$0xff]
      %v223 = vld [vmem:[%s1 + $0x20] sm:$0xff]
      %v224 = vld [vmem:[%s1 + $0x28] sm:$0xff]
      %v225 = vld [vmem:[%s1 + $0x30] sm:$0xff]
      %v226 = vld [vmem:[%s1 + $0x38] sm:$0xff]
      %v235 = vlaneseq
      %v236 = vand.u32 %v235, 127
      %v237 = vlaneseq
      %v238 = vshrl.u32 %v237, 7
      %v239 = vsub.s32 %v236, %v238
      %v240 = vrot.slane %v211, %v239
      %v241 = vadd.s32 %v236, 4294967288
      %v242 = vlaneseq
      %v243 = vshrl.u32 %v242, 7
      %v244 = vsub.s32 %v241, %v243
      %v245 = vrot.slane %v212, %v244
      %vm246 = vcmask 130112
      %v247 = vsel %vm246, %v245, %v240
      %v248 = vadd.s32 %v236, 4294967280
      %v249 = vlaneseq
      %v250 = vshrl.u32 %v249, 7
      %v251 = vsub.s32 %v248, %v250
      %v252 = vrot.slane %v213, %v251
      %vm253 = vcmask 195712
      %v254 = vsel %vm253, %v252, %v247
      %v255 = vadd.s32 %v236, 4294967272
      %v256 = vlaneseq
      %v257 = vshrl.u32 %v256, 7
      %v258 = vsub.s32 %v255, %v257
      %v259 = vrot.slane %v214, %v258
      %vm260 = vcmask 261312
      %v261 = vsel %vm260, %v259, %v254
      %v262 = vadd.s32 %v236, 4294967264
      %v263 = vlaneseq
      %v264 = vshrl.u32 %v263, 7
      %v265 = vsub.s32 %v262, %v264
      %v266 = vrot.slane %v215, %v265
      %vm267 = vcmask 326912
      %v268 = vsel %vm267, %v266, %v261
      %v269 = vadd.s32 %v236, 4294967256
      %v270 = vlaneseq
      %v271 = vshrl.u32 %v270, 7
      %v272 = vsub.s32 %v269, %v271
      %v273 = vrot.slane %v216, %v272
      %vm274 = vcmask 392512
      %v275 = vsel %vm274, %v273, %v268
      %v276 = vadd.s32 %v236, 4294967248
      %v277 = vlaneseq
      %v278 = vshrl.u32 %v277, 7
      %v279 = vsub.s32 %v276, %v278
      %v280 = vrot.slane %v217, %v279
      %vm281 = vcmask 458112
      %v282 = vsel %vm281, %v280, %v275
      %v283 = vadd.s32 %v236, 4294967240
      %v284 = vlaneseq
      %v285 = vshrl.u32 %v284, 7
      %v286 = vsub.s32 %v283, %v285
      %v287 = vrot.slane %v218, %v286
      %vm288 = vcmask 523712
      %v289 = vsel %vm288, %v287, %v282
      %vm290 = vcmask 523264
      %v291 = vsel %vm290, %v289, 0
      %293 = vmatprep.subr.mxu0 0.0
      %294 = vmatpush1.msra.mxu0 %v219
      %295 = vmatprep.subr.mxu0 0.0
      %296 = vmatpush1.msra.mxu0 %v220
      %297 = vmatprep.subr.mxu0 0.0
      %298 = vmatpush1.msra.mxu0 %v221
      %299 = vmatprep.subr.mxu0 0.0
      %300 = vmatpush1.msra.mxu0 %v222
      %301 = vmatprep.subr.mxu0 0.0
      %302 = vmatpush1.msra.mxu0 %v223
      %303 = vmatprep.subr.mxu0 0.0
      %304 = vmatpush1.msra.mxu0 %v224
      %305 = vmatprep.subr.mxu0 0.0
      %306 = vmatpush1.msra.mxu0 %v225
      %307 = vmatprep.subr.mxu0 0.0
      %308 = vmatpush1.msra.mxu0 %v226
      %309 = vmatprep.subr.mxu0 0.0
      %310 = vmatpush1.msra.mxu0 0.0
      %311 = vmatprep.subr.mxu0 0.0
      %312 = vmatpush1.msra.mxu0 0.0
      %313 = vmatprep.subr.mxu0 0.0
      %314 = vmatpush1.msra.mxu0 0.0
      %315 = vmatprep.subr.mxu0 0.0
      %316 = vmatpush1.msra.mxu0 0.0
      %317 = vmatprep.subr.mxu0 0.0
      %318 = vmatpush1.msra.mxu0 0.0
      %319 = vmatprep.subr.mxu0 0.0
      %320 = vmatpush1.msra.mxu0 0.0
      %321 = vmatprep.subr.mxu0 0.0
      %322 = vmatpush1.msra.mxu0 0.0
      %323 = vmatprep.subr.mxu0 0.0
      %324 = vmatpush1.msra.mxu0 0.0
      %325 = vmatprep.subr.mxu0 0.0
      %326 = vmatpush1.msra.mxu0 0.0
      %327 = vmatprep.subr.mxu0 0.0
      %328 = vmatpush1.msra.mxu0 0.0
      %329 = vmatprep.subr.mxu0 0.0
      %330 = vmatpush1.msra.mxu0 0.0
      %331 = vmatprep.subr.mxu0 0.0
      %332 = vmatpush1.msra.mxu0 0.0
      %333 = vmatprep.subr.mxu0 0.0
      %334 = vmatpush1.msra.mxu0 0.0
      %335 = vmatprep.subr.mxu0 0.0
      %336 = vmatpush1.msra.mxu0 0.0
      %337 = vmatprep.subr.mxu0 0.0
      %338 = vmatpush1.msra.mxu0 0.0
      %339 = vmatprep.subr.mxu0 0.0
      %340 = vmatpush1.msra.mxu0 0.0
      %341 = vmatprep.subr.mxu0 0.0
      %342 = vmatpush1.msra.mxu0 0.0
      %343 = vmatprep.subr.mxu0 0.0
      %344 = vmatpush1.msra.mxu0 0.0
      %345 = vmatprep.subr.mxu0 0.0
      %346 = vmatpush1.msra.mxu0 0.0
      %347 = vmatprep.subr.mxu0 0.0
      %348 = vmatpush1.msra.mxu0 0.0
      %349 = vmatprep.subr.mxu0 0.0
      %350 = vmatpush1.msra.mxu0 0.0
      %351 = vmatprep.subr.mxu0 0.0
      %352 = vmatpush1.msra.mxu0 0.0
      %353 = vmatprep.subr.mxu0 0.0
      %354 = vmatpush1.msra.mxu0 0.0
      %355 = vmatprep.subr.mxu0 0.0
      %356 = vmatpush1.msra.mxu0 0.0
      %357 = vmatprep.mubr.f32.mxu0 0.0
      %358 = vmatmul.mubr.f32.gmra.mrb[0].mxu0 %v291
      %v359 = vpop.f32.mrb[0].mxu0
      %v360 = vadd.f32 0.0, %v359
      %v361 = vpop.f32.mrb[0].mxu0
      %362 = vdwg.mxu0
      %v363 = vmax.f32 %v360, 0.0
      %v364 = vld [vmem:[%s2] sm:$0xff]
      %v365 = vld [vmem:[%s2 + $0x8] sm:$0xff]
      %v366 = vld [vmem:[%s2 + $0x10] sm:$0xff]
      %v367 = vld [vmem:[%s2 + $0x18] sm:$0xff]
      %v368 = vld [vmem:[%s2 + $0x20] sm:$0xff]
      %v369 = vld [vmem:[%s2 + $0x28] sm:$0xff]
      %v370 = vld [vmem:[%s2 + $0x30] sm:$0xff]
      %v371 = vld [vmem:[%s2 + $0x38] sm:$0xff]
      %v372 = vld [vmem:[%s2 + $0x40] sm:$0xff]
      %v373 = vld [vmem:[%s2 + $0x48] sm:$0xff]
      %v374 = vld [vmem:[%s2 + $0x50] sm:$0xff]
      %v375 = vld [vmem:[%s2 + $0x58] sm:$0xff]
      %v376 = vld [vmem:[%s2 + $0x60] sm:$0xff]
      %v377 = vld [vmem:[%s2 + $0x68] sm:$0xff]
      %v378 = vld [vmem:[%s2 + $0x70] sm:$0xff]
      %v379 = vld [vmem:[%s2 + $0x78] sm:$0xff]
      %380 = vmatprep.subr.mxu0 0.0
      %381 = vmatpush1.msra.mxu0 %v364
      %382 = vmatprep.subr.mxu0 0.0
      %383 = vmatpush1.msra.mxu0 %v365
      %384 = vmatprep.subr.mxu0 0.0
      %385 = vmatpush1.msra.mxu0 %v366
      %386 = vmatprep.subr.mxu0 0.0
      %387 = vmatpush1.msra.mxu0 %v367
      %388 = vmatprep.subr.mxu0 0.0
      %389 = vmatpush1.msra.mxu0 %v368
      %390 = vmatprep.subr.mxu0 0.0
      %391 = vmatpush1.msra.mxu0 %v369
      %392 = vmatprep.subr.mxu0 0.0
      %393 = vmatpush1.msra.mxu0 %v370
      %394 = vmatprep.subr.mxu0 0.0
      %395 = vmatpush1.msra.mxu0 %v371
      %396 = vmatprep.subr.mxu0 0.0
      %397 = vmatpush1.msra.mxu0 %v372
      %398 = vmatprep.subr.mxu0 0.0
      %399 = vmatpush1.msra.mxu0 %v373
      %400 = vmatprep.subr.mxu0 0.0
      %401 = vmatpush1.msra.mxu0 %v374
      %402 = vmatprep.subr.mxu0 0.0
      %403 = vmatpush1.msra.mxu0 %v375
      %404 = vmatprep.subr.mxu0 0.0
      %405 = vmatpush1.msra.mxu0 %v376
      %406 = vmatprep.subr.mxu0 0.0
      %407 = vmatpush1.msra.mxu0 %v377
      %408 = vmatprep.subr.mxu0 0.0
      %409 = vmatpush1.msra.mxu0 %v378
      %410 = vmatprep.subr.mxu0 0.0
      %411 = vmatpush1.msra.mxu0 %v379
      %412 = vmatprep.subr.mxu0 0.0
      %413 = vmatpush1.msra.mxu0 0.0
      %414 = vmatprep.subr.mxu0 0.0
      %415 = vmatpush1.msra.mxu0 0.0
      %416 = vmatprep.subr.mxu0 0.0
      %417 = vmatpush1.msra.mxu0 0.0
      %418 = vmatprep.subr.mxu0 0.0
      %419 = vmatpush1.msra.mxu0 0.0
      %420 = vmatprep.subr.mxu0 0.0
      %421 = vmatpush1.msra.mxu0 0.0
      %422 = vmatprep.subr.mxu0 0.0
      %423 = vmatpush1.msra.mxu0 0.0
      %424 = vmatprep.subr.mxu0 0.0
      %425 = vmatpush1.msra.mxu0 0.0
      %426 = vmatprep.subr.mxu0 0.0
      %427 = vmatpush1.msra.mxu0 0.0
      %428 = vmatprep.subr.mxu0 0.0
      %429 = vmatpush1.msra.mxu0 0.0
      %430 = vmatprep.subr.mxu0 0.0
      %431 = vmatpush1.msra.mxu0 0.0
      %432 = vmatprep.subr.mxu0 0.0
      %433 = vmatpush1.msra.mxu0 0.0
      %434 = vmatprep.subr.mxu0 0.0
      %435 = vmatpush1.msra.mxu0 0.0
      %436 = vmatprep.subr.mxu0 0.0
      %437 = vmatpush1.msra.mxu0 0.0
      %438 = vmatprep.subr.mxu0 0.0
      %439 = vmatpush1.msra.mxu0 0.0
      %440 = vmatprep.subr.mxu0 0.0
      %441 = vmatpush1.msra.mxu0 0.0
      %442 = vmatprep.subr.mxu0 0.0
      %443 = vmatpush1.msra.mxu0 0.0
      %444 = vmatprep.mubr.f32.mxu0 0.0
      %445 = vmatmul.mubr.f32.gmra.mrb[0].mxu0 %v363
      %v446 = vpop.f32.mrb[0].mxu0
      %v447 = vadd.f32 0.0, %v446
      %v448 = vpop.f32.mrb[0].mxu0
      %449 = vdwg.mxu0
      %v450 = vxor.u32 %v447, 2147483648
      %v451 = vmul.f32 %v450, 1.442695
      %v452 = vpow.pop %v451
      %v453 = vadd.f32 %v452, 1.0
      %v454 = vrcp.pop %v453
      %v455 = vmul.f32 1.0, %v454
      %v456 = vlaneseq
      %v457 = vshrl.u32 %v456, 7
      %v458 = vsub.s32 0, %v457
      %v459 = vrot.slane %v455, %v458
      %461 = vbcast.lane.b32.xlu0 %v459, 256
      %v462 = vpop.permute.xlu0 %461
      %s464 = sor.u32 256, 8
      %465 = vbcast.lane.b32.xlu0 %v459, %s464
      %v466 = vpop.permute.xlu0 %465
      %s468 = sor.u32 256, 16
      %469 = vbcast.lane.b32.xlu0 %v459, %s468
      %v470 = vpop.permute.xlu0 %469
      %s472 = sor.u32 256, 24
      %473 = vbcast.lane.b32.xlu0 %v459, %s472
      %v474 = vpop.permute.xlu0 %473
      %s476 = sor.u32 256, 32
      %477 = vbcast.lane.b32.xlu0 %v459, %s476
      %v478 = vpop.permute.xlu0 %477
      %s480 = sor.u32 256, 40
      %481 = vbcast.lane.b32.xlu0 %v459, %s480
      %v482 = vpop.permute.xlu0 %481
      %s484 = sor.u32 256, 48
      %485 = vbcast.lane.b32.xlu0 %v459, %s484
      %v486 = vpop.permute.xlu0 %485
      %s488 = sor.u32 256, 56
      %489 = vbcast.lane.b32.xlu0 %v459, %s488
      %v490 = vpop.permute.xlu0 %489
      %v491 = vmul.f32 %v171, %v462
      %v492 = vmul.f32 %v172, %v462
      %v493 = vmul.f32 %v173, %v466
      %v494 = vmul.f32 %v174, %v466
      %v495 = vmul.f32 %v175, %v470
      %v496 = vmul.f32 %v176, %v470
      %v497 = vmul.f32 %v177, %v474
      %v498 = vmul.f32 %v178, %v474
      %v499 = vmul.f32 %v179, %v478
      %v500 = vmul.f32 %v180, %v478
      %v501 = vmul.f32 %v181, %v482
      %v502 = vmul.f32 %v182, %v482
      %v503 = vmul.f32 %v183, %v486
      %v504 = vmul.f32 %v184, %v486
      %v505 = vmul.f32 %v185, %v490
      %v506 = vmul.f32 %v186, %v490
      %507 = vst [vmem:[%s170] sm:$0xff] %v491
      %508 = vst [vmem:[%s170 + $0x8] sm:$0xff] %v492
      %509 = vst [vmem:[%s170 + $0x10] sm:$0xff] %v493
      %510 = vst [vmem:[%s170 + $0x18] sm:$0xff] %v494
      %511 = vst [vmem:[%s170 + $0x20] sm:$0xff] %v495
      %512 = vst [vmem:[%s170 + $0x28] sm:$0xff] %v496
      %513 = vst [vmem:[%s170 + $0x30] sm:$0xff] %v497
      %514 = vst [vmem:[%s170 + $0x38] sm:$0xff] %v498
      %515 = vst [vmem:[%s170 + $0x40] sm:$0xff] %v499
      %516 = vst [vmem:[%s170 + $0x48] sm:$0xff] %v500
      %517 = vst [vmem:[%s170 + $0x50] sm:$0xff] %v501
      %518 = vst [vmem:[%s170 + $0x58] sm:$0xff] %v502
      %519 = vst [vmem:[%s170 + $0x60] sm:$0xff] %v503
      %520 = vst [vmem:[%s170 + $0x68] sm:$0xff] %v504
      %521 = vst [vmem:[%s170 + $0x70] sm:$0xff] %v505
      %522 = vst [vmem:[%s170 + $0x78] sm:$0xff] %v506
      %p523 = scmp.lt.s32.totalorder %s14, 1
      %s524 = scalar_select %p523, %s14, 1
      %s525 = smul.addr %s524, 16
      %s526 = smul.addr %s525, 8
      %s527 = scalar_lea.vmem %s3, %s526
      // Predicated region
      $region33: #{channelwise_pallas.1} parent=31 // pred_check
        %p528 = pneg %p100
      $region34: #{channelwise_pallas.1} parent=31 // pred_check_branch
        %530 = sbr.rel (%p528) target = $region36
      $region35: #{channelwise_pallas.1} parent=31 // pred_region
        _
      $region36: #{channelwise_pallas.1} parent=31 // pred_fallthru
        _
    $region32: #{channelwise_pallas.1} parent=5 // pred_fallthru
      _
    %p531 = scmp.le.s32.totalorder 2, %s9
    // Predicated region
    $region37: #{channelwise_pallas.1} parent=5 // pred_check
      %p532 = pneg %p531
    $region38: #{channelwise_pallas.1} parent=5 // pred_check_branch
      %534 = sbr.rel (%p532) target = $region40
    $region39: #{channelwise_pallas.1} parent=5 // pred_region
      %s535 = ssub.s32 %s9, 2
      // Predicated region
      $region41: #{channelwise_pallas.1} parent=39 // pred_check
        %p536 = pneg %p106
      $region42: #{channelwise_pallas.1} parent=39 // pred_check_branch
        %538 = sbr.rel (%p536) target = $region44
      $region43: #{channelwise_pallas.1} parent=39 // pred_region
        %p539 = scmp.lt.s32.totalorder %s15, 1
        %s540 = scalar_select %p539, %s15, 1
        %s541 = smul.addr %s540, 16
        %s542 = smul.addr %s541, 8
        %s543 = scalar_lea.vmem %s3, %s542
      $region44: #{channelwise_pallas.1} parent=39 // pred_fallthru
        _
    $region40: #{channelwise_pallas.1} parent=5 // pred_fallthru
      _
  $region6: #{channelwise_pallas.1} parent=0 // loop_footer
    %s13 = sadd.s32 1, %s9
  $region7: #{channelwise_pallas.1} parent=0 // loop_footer_branch
    %8 = sbr.rel target = $region3
  $region8: #{channelwise_pallas.1} parent=0 // loop_exit
    _

</llo_original>
